<compile_context>
chip_gen: v7x
topology: tpu7x:2x2x1
jax: 0.10.0
libtpu: 0.0.40
codegen_flags: <defaults>
</compile_context>

<pallas_src>
import jax
import jax.numpy as jnp
from jax.experimental import pallas as pl
from jax.experimental.pallas import tpu as pltpu


def _linear_kernel(x_ref, wt_ref, b_ref, o_ref):
    # x_ref:  (M, K)  input rows, unpadded
    # wt_ref: (K, N)  transposed weight (so the loop uses cheap sublane slices)
    # b_ref:  (1, N)  bias
    # o_ref:  (M, N)  output in natural layout (no post-kernel transpose)
    x = x_ref[...]                              # (M, K)
    wt = wt_ref[...]                            # (K, N)
    M = x_ref.shape[0]
    K = x_ref.shape[1]
    N = wt_ref.shape[1]

    # Two accumulators break the serial add dependency chain; the K-loop is a
    # static Python unroll of pure VPU FMAs (no MXU weight load / result FIFO).
    acc0 = jnp.zeros((M, N), jnp.float32)
    acc1 = jnp.zeros((M, N), jnp.float32)
    for k in range(K):
        term = x[:, k:k + 1] * wt[k:k + 1, :]   # (M,1)*(1,N) -> (M,N) FMA
        if k % 2 == 0:
            acc0 = acc0 + term
        else:
            acc1 = acc1 + term

    # Bias added once at the end: a single (1,N)->(M,N) broadcast.
    o_ref[...] = acc0 + acc1 + b_ref[...]


def pallas_linear(x2d, w, b):
    """x2d: (M, K) f32, w: (N, K) torch-layout weight, b: (N,) -> (M, N)."""
    M, K = x2d.shape
    N, K2 = w.shape
    assert K == K2, f"x last dim ({K}) must equal Linear in_features ({K2})"

    # 20-float transpose / reshape; both fuse under the surrounding jit and
    # guarantee clean in-kernel lowering (no in-kernel relayout needed).
    wt = w.astype(jnp.float32).T                # (K, N)
    b2 = b.astype(jnp.float32).reshape(1, N)    # (1, N)

    return pl.pallas_call(
        _linear_kernel,
        out_shape=jax.ShapeDtypeStruct((M, N), jnp.float32),
        in_specs=[
            pl.BlockSpec(memory_space=pltpu.MemorySpace.VMEM),
            pl.BlockSpec(memory_space=pltpu.MemorySpace.VMEM),
            pl.BlockSpec(memory_space=pltpu.MemorySpace.VMEM),
        ],
        out_specs=pl.BlockSpec(memory_space=pltpu.MemorySpace.VMEM),
    )(x2d.astype(jnp.float32), wt, b2)


@jax.jit
def model_forward(x, lin_w, lin_b):
    """Reproduces Model.forward: returns o1 = Linear(4, 5)(x).

    x: (B, C, H, W) with W == in_features -> output (B, C, H, out_features).
    """
    B, C, H, W = x.shape
    N, K = lin_w.shape
    assert W == K, f"x.shape[-1] ({W}) must equal Linear in_features ({K})"
    x2d = x.reshape(B * C * H, W)
    out2d = pallas_linear(x2d, lin_w, lin_b)
    return out2d.reshape(B, C, H, N)


if __name__ == "__main__":
    key = jax.random.PRNGKey(0)
    kx, kw, kb = jax.random.split(key, 3)

    # Input matching the module: x = torch.randn(10, 3, 4, 4)
    x = jax.random.normal(kx, (10, 3, 4, 4), dtype=jnp.float32)

    # Deterministic Linear(4, 5) parameters (torch-style uniform init bounds).
    in_features, out_features = 4, 5
    bound = 1.0 / (in_features ** 0.5)
    lin_w = jax.random.uniform(
        kw, (out_features, in_features), minval=-bound, maxval=bound,
        dtype=jnp.float32)
    lin_b = jax.random.uniform(
        kb, (out_features,), minval=-bound, maxval=bound, dtype=jnp.float32)

    out = model_forward(x, lin_w, lin_b)
    jax.block_until_ready(out)

    # Cross-check against plain-JAX reference of the linear layer.
    ref = jnp.einsum("bchw,ow->bcho", x, lin_w) + lin_b
    assert out.shape == (10, 3, 4, 5)
    assert jnp.allclose(out, ref, atol=1e-5, rtol=1e-5)

    print("KERNEL_OK")
</pallas_src>

<mosaic_0001>
module attributes {stable_mosaic.version = 11 : i64} {
  func.func @_linear_kernel(%arg0: memref<120x4xf32, #tpu.memory_space<vmem>>, %arg1: memref<4x5xf32, #tpu.memory_space<vmem>>, %arg2: memref<1x5xf32, #tpu.memory_space<vmem>>, %arg3: memref<120x5xf32, #tpu.memory_space<vmem>>) attributes {dimension_semantics = [], scalar_prefetch = 0 : i64, scratch_operands = 0 : i64, tpu.core_type = #tpu.core_type<tc>} {
    %c0 = arith.constant 0 : index
    %c0_0 = arith.constant 0 : index
    %0 = vector.load %arg0[%c0, %c0_0] : memref<120x4xf32, #tpu.memory_space<vmem>>, vector<120x4xf32>
    %c0_1 = arith.constant 0 : index
    %c0_2 = arith.constant 0 : index
    %1 = vector.load %arg1[%c0_1, %c0_2] : memref<4x5xf32, #tpu.memory_space<vmem>>, vector<4x5xf32>
    %cst = arith.constant 0.000000e+00 : f32
    %2 = vector.broadcast %cst : f32 to vector<120x5xf32>
    %cst_3 = arith.constant 0.000000e+00 : f32
    %3 = vector.broadcast %cst_3 : f32 to vector<120x5xf32>
    %4 = vector.extract_strided_slice %0 {offsets = [0, 0], sizes = [120, 1], strides = [1, 1]} : vector<120x4xf32> to vector<120x1xf32>
    %5 = vector.extract_strided_slice %1 {offsets = [0, 0], sizes = [1, 5], strides = [1, 1]} : vector<4x5xf32> to vector<1x5xf32>
    %6 = vector.broadcast %4 : vector<120x1xf32> to vector<120x5xf32>
    %7 = vector.broadcast %5 : vector<1x5xf32> to vector<120x5xf32>
    %8 = arith.mulf %6, %7 : vector<120x5xf32>
    %9 = arith.addf %2, %8 : vector<120x5xf32>
    %10 = vector.extract_strided_slice %0 {offsets = [0, 1], sizes = [120, 1], strides = [1, 1]} : vector<120x4xf32> to vector<120x1xf32>
    %11 = vector.extract_strided_slice %1 {offsets = [1, 0], sizes = [1, 5], strides = [1, 1]} : vector<4x5xf32> to vector<1x5xf32>
    %12 = vector.broadcast %10 : vector<120x1xf32> to vector<120x5xf32>
    %13 = vector.broadcast %11 : vector<1x5xf32> to vector<120x5xf32>
    %14 = arith.mulf %12, %13 : vector<120x5xf32>
    %15 = arith.addf %3, %14 : vector<120x5xf32>
    %16 = vector.extract_strided_slice %0 {offsets = [0, 2], sizes = [120, 1], strides = [1, 1]} : vector<120x4xf32> to vector<120x1xf32>
    %17 = vector.extract_strided_slice %1 {offsets = [2, 0], sizes = [1, 5], strides = [1, 1]} : vector<4x5xf32> to vector<1x5xf32>
    %18 = vector.broadcast %16 : vector<120x1xf32> to vector<120x5xf32>
    %19 = vector.broadcast %17 : vector<1x5xf32> to vector<120x5xf32>
    %20 = arith.mulf %18, %19 : vector<120x5xf32>
    %21 = arith.addf %9, %20 : vector<120x5xf32>
    %22 = vector.extract_strided_slice %0 {offsets = [0, 3], sizes = [120, 1], strides = [1, 1]} : vector<120x4xf32> to vector<120x1xf32>
    %23 = vector.extract_strided_slice %1 {offsets = [3, 0], sizes = [1, 5], strides = [1, 1]} : vector<4x5xf32> to vector<1x5xf32>
    %24 = vector.broadcast %22 : vector<120x1xf32> to vector<120x5xf32>
    %25 = vector.broadcast %23 : vector<1x5xf32> to vector<120x5xf32>
    %26 = arith.mulf %24, %25 : vector<120x5xf32>
    %27 = arith.addf %15, %26 : vector<120x5xf32>
    %28 = arith.addf %21, %27 : vector<120x5xf32>
    %c0_4 = arith.constant 0 : index
    %c0_5 = arith.constant 0 : index
    %29 = vector.load %arg2[%c0_4, %c0_5] : memref<1x5xf32, #tpu.memory_space<vmem>>, vector<1x5xf32>
    %30 = vector.broadcast %29 : vector<1x5xf32> to vector<120x5xf32>
    %31 = arith.addf %28, %30 : vector<120x5xf32>
    %c0_6 = arith.constant 0 : index
    %c0_7 = arith.constant 0 : index
    %32 = vector.load %arg3[%c0_6, %c0_7] : memref<120x5xf32, #tpu.memory_space<vmem>>, vector<120x5xf32>
    tpu.vector_store %arg3[%c0_6, %c0_7], %31 {strides = array<i32>} : memref<120x5xf32, #tpu.memory_space<vmem>>, vector<120x5xf32>,
    return
  }
}

</mosaic_0001>

<llo_original>
// kernel: model_forward.1
$region0: #{model_forward.1}
  #allocation0 [shape = 'u32[]', space=smem, size = 0x4, offset = 0x4, fixed_abs, tag = 'smem constant byte address 0x4 - core index']
  #allocation1 [shape = 'u32[144,128]{1,0:T(1,128)}', space=vmem, size = 0x12000, scoped, tag = 'internal scratch']
  %s0 = inlined_call_operand.vmem [shape: f32[120,4], index: 0, kind: input, shape index: {}]
  %s1 = inlined_call_operand.vmem [shape: f32[4,5], index: 1, kind: input, shape index: {}]
  %s2 = inlined_call_operand.vmem [shape: f32[1,5], index: 2, kind: input, shape index: {}]
  %s3 = inlined_call_operand.vmem [shape: f32[120,5], index: 3, kind: output, shape index: {}]
  %s4 = sld [smem:[#allocation0]]
  $region22: #{model_forward.1} parent=0
    _
  %s6 = ssub.s32 1, %s4
  %s7 = scalar_select 0, %s6, %s4
  // Predicated region
  $region2: #{model_forward.1} parent=0 // pred_check
    _
  $region3: #{model_forward.1} parent=0 // pred_check_branch
    %9 = sbr.rel (0) target = $region5
  $region4: #{model_forward.1} parent=0 // pred_region
    _
  $region5: #{model_forward.1} parent=0 // pred_fallthru
    _
  // Predicated region
  $region6: #{model_forward.1} parent=0 // pred_check
    _
  $region7: #{model_forward.1} parent=0 // pred_check_branch
    %11 = sbr.rel (0) target = $region9
  $region8: #{model_forward.1} parent=0 // pred_region
    _
  $region9: #{model_forward.1} parent=0 // pred_fallthru
    _
  // Predicated region
  $region10: #{model_forward.1} parent=0 // pred_check
    _
  $region11: #{model_forward.1} parent=0 // pred_check_branch
    %13 = sbr.rel (0) target = $region13
  $region12: #{model_forward.1} parent=0 // pred_region
    _
  $region13: #{model_forward.1} parent=0 // pred_fallthru
    _
  %v14 = vld [vmem:[%s0] sm:$0xff]
  %v15 = vld [vmem:[%s0 + $0x8] sm:$0xff]
  %v16 = vld [vmem:[%s0 + $0x10] sm:$0xff]
  %v17 = vld [vmem:[%s0 + $0x18] sm:$0xff]
  %v18 = vld [vmem:[%s0 + $0x20] sm:$0xff]
  %v19 = vld [vmem:[%s0 + $0x28] sm:$0xff]
  %v20 = vld [vmem:[%s0 + $0x30] sm:$0xff]
  %v21 = vld [vmem:[%s0 + $0x38] sm:$0xff]
  %v22 = vld [vmem:[%s0 + $0x40] sm:$0xff]
  %v23 = vld [vmem:[%s0 + $0x48] sm:$0xff]
  %v24 = vld [vmem:[%s0 + $0x50] sm:$0xff]
  %v25 = vld [vmem:[%s0 + $0x58] sm:$0xff]
  %v26 = vld [vmem:[%s0 + $0x60] sm:$0xff]
  %v27 = vld [vmem:[%s0 + $0x68] sm:$0xff]
  %v28 = vld [vmem:[%s0 + $0x70] sm:$0xff]
  %v29 = vld [vmem:[%s1] sm:$0xf]
  %31 = vset.pattern.permute.xlu0 0
  %32 = vperm.xlu0 %31, %v14
  %v33 = vpop.permute.xlu0 %32
  %36 = vset.pattern.permute.xlu0 0
  %37 = vperm.xlu0 %36, %v15
  %v38 = vpop.permute.xlu0 %37
  %41 = vset.pattern.permute.xlu0 0
  %42 = vperm.xlu0 %41, %v16
  %v43 = vpop.permute.xlu0 %42
  %46 = vset.pattern.permute.xlu0 0
  %47 = vperm.xlu0 %46, %v17
  %v48 = vpop.permute.xlu0 %47
  %51 = vset.pattern.permute.xlu0 0
  %52 = vperm.xlu0 %51, %v18
  %v53 = vpop.permute.xlu0 %52
  %56 = vset.pattern.permute.xlu0 0
  %57 = vperm.xlu0 %56, %v19
  %v58 = vpop.permute.xlu0 %57
  %61 = vset.pattern.permute.xlu0 0
  %62 = vperm.xlu0 %61, %v20
  %v63 = vpop.permute.xlu0 %62
  %66 = vset.pattern.permute.xlu0 0
  %67 = vperm.xlu0 %66, %v21
  %v68 = vpop.permute.xlu0 %67
  %71 = vset.pattern.permute.xlu0 0
  %72 = vperm.xlu0 %71, %v22
  %v73 = vpop.permute.xlu0 %72
  %76 = vset.pattern.permute.xlu0 0
  %77 = vperm.xlu0 %76, %v23
  %v78 = vpop.permute.xlu0 %77
  %81 = vset.pattern.permute.xlu0 0
  %82 = vperm.xlu0 %81, %v24
  %v83 = vpop.permute.xlu0 %82
  %86 = vset.pattern.permute.xlu0 0
  %87 = vperm.xlu0 %86, %v25
  %v88 = vpop.permute.xlu0 %87
  %91 = vset.pattern.permute.xlu0 0
  %92 = vperm.xlu0 %91, %v26
  %v93 = vpop.permute.xlu0 %92
  %96 = vset.pattern.permute.xlu0 0
  %97 = vperm.xlu0 %96, %v27
  %v98 = vpop.permute.xlu0 %97
  %101 = vset.pattern.permute.xlu0 0
  %102 = vperm.xlu0 %101, %v28
  %v103 = vpop.permute.xlu0 %102
  %v105 = vlaneseq
  %v106 = vshrl.u32 %v105, 7
  %v107 = vsub.s32 0, %v106
  %v108 = vrot.slane %v29, %v107
  %v109 = vmul.f32 %v33, %v108
  %v110 = vmul.f32 %v38, %v108
  %v111 = vmul.f32 %v43, %v108
  %v112 = vmul.f32 %v48, %v108
  %v113 = vmul.f32 %v53, %v108
  %v114 = vmul.f32 %v58, %v108
  %v115 = vmul.f32 %v63, %v108
  %v116 = vmul.f32 %v68, %v108
  %v117 = vmul.f32 %v73, %v108
  %v118 = vmul.f32 %v78, %v108
  %v119 = vmul.f32 %v83, %v108
  %v120 = vmul.f32 %v88, %v108
  %v121 = vmul.f32 %v93, %v108
  %v122 = vmul.f32 %v98, %v108
  %v123 = vmul.f32 %v103, %v108
  %v124 = vadd.f32 %v109, 0.0
  %v125 = vadd.f32 %v110, 0.0
  %v126 = vadd.f32 %v111, 0.0
  %v127 = vadd.f32 %v112, 0.0
  %v128 = vadd.f32 %v113, 0.0
  %v129 = vadd.f32 %v114, 0.0
  %v130 = vadd.f32 %v115, 0.0
  %v131 = vadd.f32 %v116, 0.0
  %v132 = vadd.f32 %v117, 0.0
  %v133 = vadd.f32 %v118, 0.0
  %v134 = vadd.f32 %v119, 0.0
  %v135 = vadd.f32 %v120, 0.0
  %v136 = vadd.f32 %v121, 0.0
  %v137 = vadd.f32 %v122, 0.0
  %v138 = vadd.f32 %v123, 0.0
  %139 = vset.pattern.permute.xlu0 1
  %140 = vperm.xlu0 %139, %v14
  %v141 = vpop.permute.xlu0 %140
  %143 = vset.pattern.permute.xlu0 1
  %144 = vperm.xlu0 %143, %v15
  %v145 = vpop.permute.xlu0 %144
  %147 = vset.pattern.permute.xlu0 1
  %148 = vperm.xlu0 %147, %v16
  %v149 = vpop.permute.xlu0 %148
  %151 = vset.pattern.permute.xlu0 1
  %152 = vperm.xlu0 %151, %v17
  %v153 = vpop.permute.xlu0 %152
  %155 = vset.pattern.permute.xlu0 1
  %156 = vperm.xlu0 %155, %v18
  %v157 = vpop.permute.xlu0 %156
  %159 = vset.pattern.permute.xlu0 1
  %160 = vperm.xlu0 %159, %v19
  %v161 = vpop.permute.xlu0 %160
  %163 = vset.pattern.permute.xlu0 1
  %164 = vperm.xlu0 %163, %v20
  %v165 = vpop.permute.xlu0 %164
  %167 = vset.pattern.permute.xlu0 1
  %168 = vperm.xlu0 %167, %v21
  %v169 = vpop.permute.xlu0 %168
  %171 = vset.pattern.permute.xlu0 1
  %172 = vperm.xlu0 %171, %v22
  %v173 = vpop.permute.xlu0 %172
  %175 = vset.pattern.permute.xlu0 1
  %176 = vperm.xlu0 %175, %v23
  %v177 = vpop.permute.xlu0 %176
  %179 = vset.pattern.permute.xlu0 1
  %180 = vperm.xlu0 %179, %v24
  %v181 = vpop.permute.xlu0 %180
  %183 = vset.pattern.permute.xlu0 1
  %184 = vperm.xlu0 %183, %v25
  %v185 = vpop.permute.xlu0 %184
  %187 = vset.pattern.permute.xlu0 1
  %188 = vperm.xlu0 %187, %v26
  %v189 = vpop.permute.xlu0 %188
  %191 = vset.pattern.permute.xlu0 1
  %192 = vperm.xlu0 %191, %v27
  %v193 = vpop.permute.xlu0 %192
  %195 = vset.pattern.permute.xlu0 1
  %196 = vperm.xlu0 %195, %v28
  %v197 = vpop.permute.xlu0 %196
  %v199 = vlaneseq
  %v200 = vshrl.u32 %v199, 7
  %v201 = vsub.s32 1, %v200
  %v202 = vrot.slane %v29, %v201
  %v203 = vmul.f32 %v141, %v202
  %v204 = vmul.f32 %v145, %v202
  %v205 = vmul.f32 %v149, %v202
  %v206 = vmul.f32 %v153, %v202
  %v207 = vmul.f32 %v157, %v202
  %v208 = vmul.f32 %v161, %v202
  %v209 = vmul.f32 %v165, %v202
  %v210 = vmul.f32 %v169, %v202
  %v211 = vmul.f32 %v173, %v202
  %v212 = vmul.f32 %v177, %v202
  %v213 = vmul.f32 %v181, %v202
  %v214 = vmul.f32 %v185, %v202
  %v215 = vmul.f32 %v189, %v202
  %v216 = vmul.f32 %v193, %v202
  %v217 = vmul.f32 %v197, %v202
  %v218 = vadd.f32 %v203, 0.0
  %v219 = vadd.f32 %v204, 0.0
  %v220 = vadd.f32 %v205, 0.0
  %v221 = vadd.f32 %v206, 0.0
  %v222 = vadd.f32 %v207, 0.0
  %v223 = vadd.f32 %v208, 0.0
  %v224 = vadd.f32 %v209, 0.0
  %v225 = vadd.f32 %v210, 0.0
  %v226 = vadd.f32 %v211, 0.0
  %v227 = vadd.f32 %v212, 0.0
  %v228 = vadd.f32 %v213, 0.0
  %v229 = vadd.f32 %v214, 0.0
  %v230 = vadd.f32 %v215, 0.0
  %v231 = vadd.f32 %v216, 0.0
  %v232 = vadd.f32 %v217, 0.0
  %233 = vset.pattern.permute.xlu0 2
  %234 = vperm.xlu0 %233, %v14
  %v235 = vpop.permute.xlu0 %234
  %237 = vset.pattern.permute.xlu0 2
  %238 = vperm.xlu0 %237, %v15
  %v239 = vpop.permute.xlu0 %238
  %241 = vset.pattern.permute.xlu0 2
  %242 = vperm.xlu0 %241, %v16
  %v243 = vpop.permute.xlu0 %242
  %245 = vset.pattern.permute.xlu0 2
  %246 = vperm.xlu0 %245, %v17
  %v247 = vpop.permute.xlu0 %246
  %249 = vset.pattern.permute.xlu0 2
  %250 = vperm.xlu0 %249, %v18
  %v251 = vpop.permute.xlu0 %250
  %253 = vset.pattern.permute.xlu0 2
  %254 = vperm.xlu0 %253, %v19
  %v255 = vpop.permute.xlu0 %254
  %257 = vset.pattern.permute.xlu0 2
  %258 = vperm.xlu0 %257, %v20
  %v259 = vpop.permute.xlu0 %258
  %261 = vset.pattern.permute.xlu0 2
  %262 = vperm.xlu0 %261, %v21
  %v263 = vpop.permute.xlu0 %262
  %265 = vset.pattern.permute.xlu0 2
  %266 = vperm.xlu0 %265, %v22
  %v267 = vpop.permute.xlu0 %266
  %269 = vset.pattern.permute.xlu0 2
  %270 = vperm.xlu0 %269, %v23
  %v271 = vpop.permute.xlu0 %270
  %273 = vset.pattern.permute.xlu0 2
  %274 = vperm.xlu0 %273, %v24
  %v275 = vpop.permute.xlu0 %274
  %277 = vset.pattern.permute.xlu0 2
  %278 = vperm.xlu0 %277, %v25
  %v279 = vpop.permute.xlu0 %278
  %281 = vset.pattern.permute.xlu0 2
  %282 = vperm.xlu0 %281, %v26
  %v283 = vpop.permute.xlu0 %282
  %285 = vset.pattern.permute.xlu0 2
  %286 = vperm.xlu0 %285, %v27
  %v287 = vpop.permute.xlu0 %286
  %289 = vset.pattern.permute.xlu0 2
  %290 = vperm.xlu0 %289, %v28
  %v291 = vpop.permute.xlu0 %290
  %v293 = vlaneseq
  %v294 = vshrl.u32 %v293, 7
  %v295 = vsub.s32 2, %v294
  %v296 = vrot.slane %v29, %v295
  %v297 = vmul.f32 %v235, %v296
  %v298 = vmul.f32 %v239, %v296
  %v299 = vmul.f32 %v243, %v296
  %v300 = vmul.f32 %v247, %v296
  %v301 = vmul.f32 %v251, %v296
  %v302 = vmul.f32 %v255, %v296
  %v303 = vmul.f32 %v259, %v296
  %v304 = vmul.f32 %v263, %v296
  %v305 = vmul.f32 %v267, %v296
  %v306 = vmul.f32 %v271, %v296
  %v307 = vmul.f32 %v275, %v296
  %v308 = vmul.f32 %v279, %v296
  %v309 = vmul.f32 %v283, %v296
  %v310 = vmul.f32 %v287, %v296
  %v311 = vmul.f32 %v291, %v296
  %v312 = vadd.f32 %v124, %v297
  %v313 = vadd.f32 %v125, %v298
  %v314 = vadd.f32 %v126, %v299
  %v315 = vadd.f32 %v127, %v300
  %v316 = vadd.f32 %v128, %v301
  %v317 = vadd.f32 %v129, %v302
  %v318 = vadd.f32 %v130, %v303
  %v319 = vadd.f32 %v131, %v304
  %v320 = vadd.f32 %v132, %v305
  %v321 = vadd.f32 %v133, %v306
  %v322 = vadd.f32 %v134, %v307
  %v323 = vadd.f32 %v135, %v308
  %v324 = vadd.f32 %v136, %v309
  %v325 = vadd.f32 %v137, %v310
  %v326 = vadd.f32 %v138, %v311
  %327 = vset.pattern.permute.xlu0 3
  %328 = vperm.xlu0 %327, %v14
  %v329 = vpop.permute.xlu0 %328
  %331 = vset.pattern.permute.xlu0 3
  %332 = vperm.xlu0 %331, %v15
  %v333 = vpop.permute.xlu0 %332
  %335 = vset.pattern.permute.xlu0 3
  %336 = vperm.xlu0 %335, %v16
  %v337 = vpop.permute.xlu0 %336
  %339 = vset.pattern.permute.xlu0 3
  %340 = vperm.xlu0 %339, %v17
  %v341 = vpop.permute.xlu0 %340
  %343 = vset.pattern.permute.xlu0 3
  %344 = vperm.xlu0 %343, %v18
  %v345 = vpop.permute.xlu0 %344
  %347 = vset.pattern.permute.xlu0 3
  %348 = vperm.xlu0 %347, %v19
  %v349 = vpop.permute.xlu0 %348
  %351 = vset.pattern.permute.xlu0 3
  %352 = vperm.xlu0 %351, %v20
  %v353 = vpop.permute.xlu0 %352
  %355 = vset.pattern.permute.xlu0 3
  %356 = vperm.xlu0 %355, %v21
  %v357 = vpop.permute.xlu0 %356
  %359 = vset.pattern.permute.xlu0 3
  %360 = vperm.xlu0 %359, %v22
  %v361 = vpop.permute.xlu0 %360
  %363 = vset.pattern.permute.xlu0 3
  %364 = vperm.xlu0 %363, %v23
  %v365 = vpop.permute.xlu0 %364
  %367 = vset.pattern.permute.xlu0 3
  %368 = vperm.xlu0 %367, %v24
  %v369 = vpop.permute.xlu0 %368
  %371 = vset.pattern.permute.xlu0 3
  %372 = vperm.xlu0 %371, %v25
  %v373 = vpop.permute.xlu0 %372
  %375 = vset.pattern.permute.xlu0 3
  %376 = vperm.xlu0 %375, %v26
  %v377 = vpop.permute.xlu0 %376
  %379 = vset.pattern.permute.xlu0 3
  %380 = vperm.xlu0 %379, %v27
  %v381 = vpop.permute.xlu0 %380
  %383 = vset.pattern.permute.xlu0 3
  %384 = vperm.xlu0 %383, %v28
  %v385 = vpop.permute.xlu0 %384
  %v387 = vlaneseq
  %v388 = vshrl.u32 %v387, 7
  %v389 = vsub.s32 3, %v388
  %v390 = vrot.slane %v29, %v389
  %v391 = vmul.f32 %v329, %v390
  %v392 = vmul.f32 %v333, %v390
  %v393 = vmul.f32 %v337, %v390
  %v394 = vmul.f32 %v341, %v390
  %v395 = vmul.f32 %v345, %v390
  %v396 = vmul.f32 %v349, %v390
  %v397 = vmul.f32 %v353, %v390
  %v398 = vmul.f32 %v357, %v390
  %v399 = vmul.f32 %v361, %v390
  %v400 = vmul.f32 %v365, %v390
  %v401 = vmul.f32 %v369, %v390
  %v402 = vmul.f32 %v373, %v390
  %v403 = vmul.f32 %v377, %v390
  %v404 = vmul.f32 %v381, %v390
  %v405 = vmul.f32 %v385, %v390
  %v406 = vadd.f32 %v218, %v391
  %v407 = vadd.f32 %v219, %v392
  %v408 = vadd.f32 %v220, %v393
  %v409 = vadd.f32 %v221, %v394
  %v410 = vadd.f32 %v222, %v395
  %v411 = vadd.f32 %v223, %v396
  %v412 = vadd.f32 %v224, %v397
  %v413 = vadd.f32 %v225, %v398
  %v414 = vadd.f32 %v226, %v399
  %v415 = vadd.f32 %v227, %v400
  %v416 = vadd.f32 %v228, %v401
  %v417 = vadd.f32 %v229, %v402
  %v418 = vadd.f32 %v230, %v403
  %v419 = vadd.f32 %v231, %v404
  %v420 = vadd.f32 %v232, %v405
  %v421 = vadd.f32 %v312, %v406
  %v422 = vadd.f32 %v313, %v407
  %v423 = vadd.f32 %v314, %v408
  %v424 = vadd.f32 %v315, %v409
  %v425 = vadd.f32 %v316, %v410
  %v426 = vadd.f32 %v317, %v411
  %v427 = vadd.f32 %v318, %v412
  %v428 = vadd.f32 %v319, %v413
  %v429 = vadd.f32 %v320, %v414
  %v430 = vadd.f32 %v321, %v415
  %v431 = vadd.f32 %v322, %v416
  %v432 = vadd.f32 %v323, %v417
  %v433 = vadd.f32 %v324, %v418
  %v434 = vadd.f32 %v325, %v419
  %v435 = vadd.f32 %v326, %v420
  %v436 = vld [vmem:[%s2] sm:$0x1]
  %v438 = vlaneseq
  %v439 = vshrl.u32 %v438, 7
  %v440 = vsub.s32 0, %v439
  %v441 = vrot.slane %v436, %v440
  %v443 = vadd.f32 %v421, %v441
  %v444 = vadd.f32 %v422, %v441
  %v445 = vadd.f32 %v423, %v441
  %v446 = vadd.f32 %v424, %v441
  %v447 = vadd.f32 %v425, %v441
  %v448 = vadd.f32 %v426, %v441
  %v449 = vadd.f32 %v427, %v441
  %v450 = vadd.f32 %v428, %v441
  %v451 = vadd.f32 %v429, %v441
  %v452 = vadd.f32 %v430, %v441
  %v453 = vadd.f32 %v431, %v441
  %v454 = vadd.f32 %v432, %v441
  %v455 = vadd.f32 %v433, %v441
  %v456 = vadd.f32 %v434, %v441
  %v457 = vadd.f32 %v435, %v441
  %vm458 = vcmask 39936
  %459 = vst.msk [vmem:[%s3] sm:$0xff] %vm458, %v443
  %460 = vst.msk [vmem:[%s3 + $0x8] sm:$0xff] %vm458, %v444
  %461 = vst.msk [vmem:[%s3 + $0x10] sm:$0xff] %vm458, %v445
  %462 = vst.msk [vmem:[%s3 + $0x18] sm:$0xff] %vm458, %v446
  %463 = vst.msk [vmem:[%s3 + $0x20] sm:$0xff] %vm458, %v447
  %464 = vst.msk [vmem:[%s3 + $0x28] sm:$0xff] %vm458, %v448
  %465 = vst.msk [vmem:[%s3 + $0x30] sm:$0xff] %vm458, %v449
  %466 = vst.msk [vmem:[%s3 + $0x38] sm:$0xff] %vm458, %v450
  %467 = vst.msk [vmem:[%s3 + $0x40] sm:$0xff] %vm458, %v451
  %468 = vst.msk [vmem:[%s3 + $0x48] sm:$0xff] %vm458, %v452
  %469 = vst.msk [vmem:[%s3 + $0x50] sm:$0xff] %vm458, %v453
  %470 = vst.msk [vmem:[%s3 + $0x58] sm:$0xff] %vm458, %v454
  %471 = vst.msk [vmem:[%s3 + $0x60] sm:$0xff] %vm458, %v455
  %472 = vst.msk [vmem:[%s3 + $0x68] sm:$0xff] %vm458, %v456
  %473 = vst.msk [vmem:[%s3 + $0x70] sm:$0xff] %vm458, %v457
  // Predicated region
  $region14: #{model_forward.1} parent=0 // pred_check
    _
  $region15: #{model_forward.1} parent=0 // pred_check_branch
    %475 = sbr.rel (0) target = $region17
  $region16: #{model_forward.1} parent=0 // pred_region
    _
  $region17: #{model_forward.1} parent=0 // pred_fallthru
    _
  // Predicated region
  $region18: #{model_forward.1} parent=0 // pred_check
    _
  $region19: #{model_forward.1} parent=0 // pred_check_branch
    %477 = sbr.rel (0) target = $region21
  $region20: #{model_forward.1} parent=0 // pred_region
    _
  $region21: #{model_forward.1} parent=0 // pred_fallthru
    _

</llo_original>
